<compile_context>
chip_gen: v5e
topology: v5e:2x2
jax: 0.10.0
libtpu: 0.0.40
codegen_flags: <defaults>
</compile_context>

<pallas_src>
import functools

import jax
import jax.numpy as jnp
from jax.experimental import pallas as pl
from jax.experimental.pallas import tpu as pltpu

BN_EPS = 1e-5
LANE = 128


def _round_up(n, m):
    return (n + m - 1) // m * m


# ----------------------------- kernel ---------------------------------------


def fcnet_kernel(x_ref, w1_ref, w2_ref, w3_ref, bias_ref, out_ref, *, hpad, cpad):
    # x_ref: (TB, x_dim) bf16 ; w*: bf16 (in, out) padded to lane multiples
    # bias_ref: (8, SLAB) f32, rows 0/1/2 = folded b1 / b2 / logits bias
    x = x_ref[...]

    # fc_block 1: (Linear+BN folded) -> ReLU -> Dropout(identity)
    h = jnp.dot(x, w1_ref[...], preferred_element_type=jnp.float32)
    h = jnp.maximum(h + bias_ref[0:1, :hpad], 0.0).astype(jnp.bfloat16)

    # fc_block 2
    h = jnp.dot(h, w2_ref[...], preferred_element_type=jnp.float32)
    h = jnp.maximum(h + bias_ref[1:2, :hpad], 0.0).astype(jnp.bfloat16)

    # logits head (lane-dense, padded to cpad columns)
    out_ref[...] = (
        jnp.dot(h, w3_ref[...], preferred_element_type=jnp.float32)
        + bias_ref[2:3, :cpad]
    )


# ----------------------------- wrapper ---------------------------------------


def fcnet_forward(x, params, *, tb=512):
    """x: (B, x_dim) float array. params: dict of PyTorch-shaped parameters."""
    B, x_dim = x.shape
    hid = params["net.0.0.weight"].shape[0]
    num_classes = params["logits.weight"].shape[0]

    HPAD = _round_up(hid, LANE)
    CPAD = _round_up(num_classes, LANE)
    SLAB = max(HPAD, CPAD)

    # ---- fold eval-mode BatchNorm into the preceding Linear (all in f32) ----
    def fold(wk):
        w = params[f"{wk}.0.weight"].astype(jnp.float32)       # (out, in)
        b = params[f"{wk}.0.bias"].astype(jnp.float32)
        g = params[f"{wk}.1.weight"].astype(jnp.float32)
        be = params[f"{wk}.1.bias"].astype(jnp.float32)
        m = params[f"{wk}.1.running_mean"].astype(jnp.float32)
        v = params[f"{wk}.1.running_var"].astype(jnp.float32)
        s = g * jax.lax.rsqrt(v + BN_EPS)
        w_f = w.T * s[None, :]                                 # (in, out)
        b_f = (b - m) * s + be
        return w_f, b_f

    w1, b1 = fold("net.0")
    w2, b2 = fold("net.1")
    w3 = params["logits.weight"].T.astype(jnp.float32)          # (hid, classes)
    b3 = params["logits.bias"].astype(jnp.float32)

    def pad2(w, rows, cols):
        return jnp.pad(w, ((0, rows - w.shape[0]), (0, cols - w.shape[1])))

    # Zero-pad so padded lanes stay exactly 0 through ReLU and never leak.
    w1p = pad2(w1, x_dim, HPAD).astype(jnp.bfloat16)             # (x_dim, HPAD)
    w2p = pad2(w2, HPAD, HPAD).astype(jnp.bfloat16)              # (HPAD, HPAD)
    w3p = pad2(w3, HPAD, CPAD).astype(jnp.bfloat16)              # (HPAD, CPAD)

    bias_slab = jnp.zeros((8, SLAB), jnp.float32)
    bias_slab = bias_slab.at[0, :HPAD].set(jnp.pad(b1, (0, HPAD - hid)))
    bias_slab = bias_slab.at[1, :HPAD].set(jnp.pad(b2, (0, HPAD - hid)))
    bias_slab = bias_slab.at[2, :CPAD].set(jnp.pad(b3, (0, CPAD - num_classes)))

    # ---- batch tiling (TB rows per grid step, multiple of 16 for bf16) ----
    TB = min(tb, _round_up(B, 16))
    B_pad = _round_up(B, TB)
    x_p = jnp.pad(x.astype(jnp.bfloat16), ((0, B_pad - B), (0, 0)))

    kernel = functools.partial(fcnet_kernel, hpad=HPAD, cpad=CPAD)

    cost = pl.CostEstimate(
        flops=2 * B_pad * (x_dim * HPAD + HPAD * HPAD + HPAD * CPAD),
        transcendentals=0,
        bytes_accessed=(
            x_p.size * 2
            + (w1p.size + w2p.size + w3p.size) * 2
            + bias_slab.size * 4
            + B_pad * CPAD * 4
        ),
    )

    out = pl.pallas_call(
        kernel,
        out_shape=jax.ShapeDtypeStruct((B_pad, CPAD), jnp.float32),
        grid=(B_pad // TB,),
        in_specs=[
            pl.BlockSpec((TB, x_dim), lambda i: (i, 0)),      # x tile, pipelined
            pl.BlockSpec((x_dim, HPAD), lambda i: (0, 0)),    # weights stay resident
            pl.BlockSpec((HPAD, HPAD), lambda i: (0, 0)),
            pl.BlockSpec((HPAD, CPAD), lambda i: (0, 0)),
            pl.BlockSpec((8, SLAB), lambda i: (0, 0)),        # fused bias slab
        ],
        out_specs=pl.BlockSpec((TB, CPAD), lambda i: (i, 0)),
        compiler_params=pltpu.CompilerParams(
            dimension_semantics=("parallel",),                 # megacore on v7x
            vmem_limit_bytes=32 * 1024 * 1024,
        ),
        cost_estimate=cost,
    )(x_p, w1p, w2p, w3p, bias_slab)

    return out[:B, :num_classes]


# ----------------------------- params / reference ----------------------------


def make_params(key, x_dim, hid_dim, num_classes):
    """Deterministic init matching the PyTorch module's parameter shapes."""
    ks = jax.random.split(key, 6)

    def linear_init(kw, kb, in_f, out_f):
        bound = 1.0 / jnp.sqrt(in_f)
        w = jax.random.uniform(kw, (out_f, in_f), jnp.float32, -bound, bound)
        b = jax.random.uniform(kb, (out_f,), jnp.float32, -bound, bound)
        return w, b

    w1, b1 = linear_init(ks[0], ks[1], x_dim, hid_dim)
    w2, b2 = linear_init(ks[2], ks[3], hid_dim, hid_dim)
    w3, b3 = linear_init(ks[4], ks[5], hid_dim, num_classes)

    return {
        "net.0.0.weight": w1, "net.0.0.bias": b1,
        "net.0.1.weight": jnp.ones((hid_dim,), jnp.float32),       # BN gamma
        "net.0.1.bias": jnp.zeros((hid_dim,), jnp.float32),        # BN beta
        "net.0.1.running_mean": jnp.zeros((hid_dim,), jnp.float32),
        "net.0.1.running_var": jnp.ones((hid_dim,), jnp.float32),
        "net.1.0.weight": w2, "net.1.0.bias": b2,
        "net.1.1.weight": jnp.ones((hid_dim,), jnp.float32),
        "net.1.1.bias": jnp.zeros((hid_dim,), jnp.float32),
        "net.1.1.running_mean": jnp.zeros((hid_dim,), jnp.float32),
        "net.1.1.running_var": jnp.ones((hid_dim,), jnp.float32),
        "logits.weight": w3, "logits.bias": b3,
    }


def reference_forward(x, p):
    """Pure-JAX f32 reference (eval-mode FCNet.forward, unfolded BN)."""
    def block(h, wk):
        h = h @ p[f"{wk}.0.weight"].T + p[f"{wk}.0.bias"]
        h = (h - p[f"{wk}.1.running_mean"]) / jnp.sqrt(p[f"{wk}.1.running_var"] + BN_EPS)
        h = h * p[f"{wk}.1.weight"] + p[f"{wk}.1.bias"]
        return jnp.maximum(h, 0.0)

    h = block(x, "net.0")
    h = block(h, "net.1")
    return h @ p["logits.weight"].T + p["logits.bias"]


if __name__ == "__main__":
    B, X_DIM, HID_DIM, NUM_CLASSES = 8, 64, 32, 6

    key = jax.random.PRNGKey(0)
    k_x, k_p = jax.random.split(key)
    x = jax.random.normal(k_x, (B, X_DIM), jnp.float32)
    params = make_params(k_p, X_DIM, HID_DIM, NUM_CLASSES)

    out = fcnet_forward(x, params)
    out = jax.block_until_ready(out)

    ref = reference_forward(x, params)
    assert out.shape == (B, NUM_CLASSES)
    # bf16 MXU operands -> loosen tolerance vs the f32 reference.
    assert jnp.allclose(out, ref, atol=3e-2, rtol=3e-2), "kernel mismatch vs reference"

    print("KERNEL_OK")
</pallas_src>

<mosaic_0001>
module attributes {stable_mosaic.version = 11 : i64} {
  func.func @fcnet_kernel(%arg0: i32, %arg1: memref<16x64xbf16, #tpu.memory_space<vmem>>, %arg2: memref<64x128xbf16, #tpu.memory_space<vmem>>, %arg3: memref<128x128xbf16, #tpu.memory_space<vmem>>, %arg4: memref<128x128xbf16, #tpu.memory_space<vmem>>, %arg5: memref<8x128xf32, #tpu.memory_space<vmem>>, %arg6: memref<16x128xf32, #tpu.memory_space<vmem>>) attributes {dimension_semantics = [#tpu.dimension_semantics<parallel>], iteration_bounds = array<i64: 1>, scalar_prefetch = 0 : i64, scratch_operands = 0 : i64, tpu.core_type = #tpu.core_type<tc>, window_params = [{transform_indices = @transform_0, window_bounds = array<i64: 16, 64>}, {pipeline_mode = #tpu.pipeline_mode<synchronous>, transform_indices = @transform_1, window_bounds = array<i64: 64, 128>}, {pipeline_mode = #tpu.pipeline_mode<synchronous>, transform_indices = @transform_2, window_bounds = array<i64: 128, 128>}, {pipeline_mode = #tpu.pipeline_mode<synchronous>, transform_indices = @transform_3, window_bounds = array<i64: 128, 128>}, {pipeline_mode = #tpu.pipeline_mode<synchronous>, transform_indices = @transform_4, window_bounds = array<i64: 8, 128>}, {transform_indices = @transform_5, window_bounds = array<i64: 16, 128>}]} {
    %c0 = arith.constant 0 : index
    %c0_0 = arith.constant 0 : index
    %0 = vector.load %arg1[%c0, %c0_0] : memref<16x64xbf16, #tpu.memory_space<vmem>>, vector<16x64xbf16>
    %c0_1 = arith.constant 0 : index
    %c0_2 = arith.constant 0 : index
    %1 = vector.load %arg2[%c0_1, %c0_2] : memref<64x128xbf16, #tpu.memory_space<vmem>>, vector<64x128xbf16>
    %cst = arith.constant dense<0.000000e+00> : vector<16x128xf32>
    %2 = tpu.matmul %0, %1, %cst {dimension_numbers = #tpu.dot_dimension_numbers<[1], [0], [0], [1], [0, 0, 1, 1], [], []>} : vector<16x64xbf16>, vector<64x128xbf16>, vector<16x128xf32> -> vector<16x128xf32>
    %c0_3 = arith.constant 0 : index
    %c0_4 = arith.constant 0 : index
    %3 = vector.load %arg5[%c0_3, %c0_4] : memref<8x128xf32, #tpu.memory_space<vmem>>, vector<1x128xf32>
    %4 = vector.broadcast %3 : vector<1x128xf32> to vector<16x128xf32>
    %5 = arith.addf %2, %4 : vector<16x128xf32>
    %cst_5 = arith.constant 0.000000e+00 : f32
    %6 = vector.broadcast %cst_5 : f32 to vector<16x128xf32>
    %7 = arith.maximumf %5, %6 : vector<16x128xf32>
    %8 = arith.truncf %7 : vector<16x128xf32> to vector<16x128xbf16>
    %c0_6 = arith.constant 0 : index
    %c0_7 = arith.constant 0 : index
    %9 = vector.load %arg3[%c0_6, %c0_7] : memref<128x128xbf16, #tpu.memory_space<vmem>>, vector<128x128xbf16>
    %cst_8 = arith.constant dense<0.000000e+00> : vector<16x128xf32>
    %10 = tpu.matmul %8, %9, %cst_8 {dimension_numbers = #tpu.dot_dimension_numbers<[1], [0], [0], [1], [0, 0, 1, 1], [], []>} : vector<16x128xbf16>, vector<128x128xbf16>, vector<16x128xf32> -> vector<16x128xf32>
    %c1 = arith.constant 1 : index
    %c0_9 = arith.constant 0 : index
    %11 = vector.load %arg5[%c1, %c0_9] : memref<8x128xf32, #tpu.memory_space<vmem>>, vector<1x128xf32>
    %12 = vector.broadcast %11 : vector<1x128xf32> to vector<16x128xf32>
    %13 = arith.addf %10, %12 : vector<16x128xf32>
    %cst_10 = arith.constant 0.000000e+00 : f32
    %14 = vector.broadcast %cst_10 : f32 to vector<16x128xf32>
    %15 = arith.maximumf %13, %14 : vector<16x128xf32>
    %16 = arith.truncf %15 : vector<16x128xf32> to vector<16x128xbf16>
    %c0_11 = arith.constant 0 : index
    %c0_12 = arith.constant 0 : index
    %17 = vector.load %arg4[%c0_11, %c0_12] : memref<128x128xbf16, #tpu.memory_space<vmem>>, vector<128x128xbf16>
    %cst_13 = arith.constant dense<0.000000e+00> : vector<16x128xf32>
    %18 = tpu.matmul %16, %17, %cst_13 {dimension_numbers = #tpu.dot_dimension_numbers<[1], [0], [0], [1], [0, 0, 1, 1], [], []>} : vector<16x128xbf16>, vector<128x128xbf16>, vector<16x128xf32> -> vector<16x128xf32>
    %c2 = arith.constant 2 : index
    %c0_14 = arith.constant 0 : index
    %19 = vector.load %arg5[%c2, %c0_14] : memref<8x128xf32, #tpu.memory_space<vmem>>, vector<1x128xf32>
    %20 = vector.broadcast %19 : vector<1x128xf32> to vector<16x128xf32>
    %21 = arith.addf %18, %20 : vector<16x128xf32>
    %c0_15 = arith.constant 0 : index
    %c0_16 = arith.constant 0 : index
    %22 = vector.load %arg6[%c0_15, %c0_16] : memref<16x128xf32, #tpu.memory_space<vmem>>, vector<16x128xf32>
    tpu.vector_store %arg6[%c0_15, %c0_16], %21 {strides = array<i32>} : memref<16x128xf32, #tpu.memory_space<vmem>>, vector<16x128xf32>,
    return
  }
  func.func @transform_0(%arg0: i32) -> (i32, i32) {
    %c0_i32 = arith.constant 0 : i32
    %c0_i32_0 = arith.constant 0 : i32
    return %arg0, %c0_i32 : i32, i32
  }
  func.func @transform_1(%arg0: i32) -> (i32, i32) {
    %c0_i32 = arith.constant 0 : i32
    %c0_i32_0 = arith.constant 0 : i32
    %c0_i32_1 = arith.constant 0 : i32
    return %c0_i32, %c0_i32_0 : i32, i32
  }
  func.func @transform_2(%arg0: i32) -> (i32, i32) {
    %c0_i32 = arith.constant 0 : i32
    %c0_i32_0 = arith.constant 0 : i32
    %c0_i32_1 = arith.constant 0 : i32
    return %c0_i32, %c0_i32_0 : i32, i32
  }
  func.func @transform_3(%arg0: i32) -> (i32, i32) {
    %c0_i32 = arith.constant 0 : i32
    %c0_i32_0 = arith.constant 0 : i32
    %c0_i32_1 = arith.constant 0 : i32
    return %c0_i32, %c0_i32_0 : i32, i32
  }
  func.func @transform_4(%arg0: i32) -> (i32, i32) {
    %c0_i32 = arith.constant 0 : i32
    %c0_i32_0 = arith.constant 0 : i32
    %c0_i32_1 = arith.constant 0 : i32
    return %c0_i32, %c0_i32_0 : i32, i32
  }
  func.func @transform_5(%arg0: i32) -> (i32, i32) {
    %c0_i32 = arith.constant 0 : i32
    %c0_i32_0 = arith.constant 0 : i32
    return %arg0, %c0_i32 : i32, i32
  }
}

</mosaic_0001>

<llo_original>
// kernel: tpu_custom_call.1
$region0: #{tpu_custom_call.1}
  #allocation0 [shape = 'u32[]', space=smem, size = 0x4, offset = 0x4, fixed_abs, tag = 'smem constant byte address 0x4 - core index']
  #allocation1 [shape = 'u32[72,128]{1,0:T(1,128)}', space=vmem, size = 0x9000, scoped, tag = 'internal scratch']
  %s0 = inlined_call_operand.hbm [shape: bf16[16,64], index: 0, kind: input, shape index: {}]
  %s1 = inlined_call_operand.hbm [shape: bf16[64,128], index: 1, kind: input, shape index: {}]
  %s2 = inlined_call_operand.hbm [shape: bf16[128,128], index: 2, kind: input, shape index: {}]
  %s3 = inlined_call_operand.hbm [shape: bf16[128,128], index: 3, kind: input, shape index: {}]
  %s4 = inlined_call_operand.hbm [shape: f32[8,128], index: 4, kind: input, shape index: {}]
  %s5 = inlined_call_operand.hbm [shape: f32[16,128], index: 5, kind: output, shape index: {}]
  %s6 = sld [smem:[#allocation0]]
  $region50: #{tpu_custom_call.1} parent=0
    _
  %s8 = ssub.s32 1, %s6
  %s9 = scalar_select 0, %s8, %s6
  $region1: #{tpu_custom_call.1} parent=0
    #allocation2 [shape = 'u8[4096]{0}', space=vmem, size = 0x1000, scoped, tag = 'input window, operand 0, single buffered']
    #allocation3 [shape = 's32[1]{0}', space=sflag, size = 0x4, scoped, tag = 'scoped memory for tpu_custom_call.1']
    #allocation4 [shape = 's32[1]{0}', space=sflag, size = 0x4, scoped, tag = 'scoped memory for tpu_custom_call.1']
    #allocation5 [shape = 'u8[16384]{0}', space=vmem, size = 0x4000, scoped, tag = 'input window, operand 1, single buffered']
    #allocation6 [shape = 's32[1]{0}', space=sflag, size = 0x4, scoped, tag = 'scoped memory for tpu_custom_call.1']
    #allocation7 [shape = 'u8[32768]{0}', space=vmem, size = 0x8000, scoped, tag = 'input window, operand 2, single buffered']
    #allocation8 [shape = 'u8[32768]{0}', space=vmem, size = 0x8000, scoped, tag = 'input window, operand 3, single buffered']
    #allocation9 [shape = 's32[1]{0}', space=sflag, size = 0x4, scoped, tag = 'scoped memory for tpu_custom_call.1']
    #allocation10 [shape = 'u8[4096]{0}', space=vmem, size = 0x1000, scoped, tag = 'input window, operand 4, single buffered']
    #allocation11 [shape = 'u8[8192]{0}', space=vmem, size = 0x2000, scoped, tag = 'output window, operand 0, single buffered']
    %10 = vsyncpa [#allocation3], 0
    %11 = vsyncpa [#allocation6], 0
    %12 = vsyncpa [#allocation9], 0
    %13 = vsyncpa [#allocation4], 0
    // Predicated region
    $region2: #{tpu_custom_call.1} parent=1 // pred_check
      _
    $region3: #{tpu_custom_call.1} parent=1 // pred_check_branch
      %15 = sbr.rel (0) target = $region5
    $region4: #{tpu_custom_call.1} parent=1 // pred_region
      %17 = vsyncadd [#allocation3], 0
      %s18 = sshll.u32 %s0, 4
      %s19 = int_to_ptr.hbm [resolvable:$true] %s18
      %s20 = sshll.u32 [#allocation2], 4
      %s21 = int_to_ptr.vmem [resolvable:$true] %s20
      %26 = dma.hbm_to_vmem [thread:$0]  %s19, 128, %s21, [#allocation3], 64, 64, 4
    $region5: #{tpu_custom_call.1} parent=1 // pred_fallthru
      _
    // Predicated region
    $region6: #{tpu_custom_call.1} parent=1 // pred_check
      _
    $region7: #{tpu_custom_call.1} parent=1 // pred_check_branch
      %28 = sbr.rel (0) target = $region9
    $region8: #{tpu_custom_call.1} parent=1 // pred_region
      %30 = vsyncadd [#allocation6], 0
      %s31 = sshll.u32 %s1, 4
      %s32 = int_to_ptr.hbm [resolvable:$true] %s31
      %s33 = sshll.u32 [#allocation5], 4
      %s34 = int_to_ptr.vmem [resolvable:$true] %s33
      %39 = dma.hbm_to_vmem [thread:$0]  %s32, 512, %s34, [#allocation6], 64, 64, 4
    $region9: #{tpu_custom_call.1} parent=1 // pred_fallthru
      _
    // Predicated region
    $region10: #{tpu_custom_call.1} parent=1 // pred_check
      _
    $region11: #{tpu_custom_call.1} parent=1 // pred_check_branch
      %41 = sbr.rel (0) target = $region13
    $region12: #{tpu_custom_call.1} parent=1 // pred_region
      %43 = vsyncadd [#allocation6], 0
      %s44 = sshll.u32 %s2, 4
      %s45 = int_to_ptr.hbm [resolvable:$true] %s44
      %s46 = sshll.u32 [#allocation7], 4
      %s47 = int_to_ptr.vmem [resolvable:$true] %s46
      %52 = dma.hbm_to_vmem [thread:$0]  %s45, 1024, %s47, [#allocation6], 64, 64, 4
    $region13: #{tpu_custom_call.1} parent=1 // pred_fallthru
      _
    // Predicated region
    $region14: #{tpu_custom_call.1} parent=1 // pred_check
      _
    $region15: #{tpu_custom_call.1} parent=1 // pred_check_branch
      %54 = sbr.rel (0) target = $region17
    $region16: #{tpu_custom_call.1} parent=1 // pred_region
      %56 = vsyncadd [#allocation9], 0
      %s57 = sshll.u32 %s3, 4
      %s58 = int_to_ptr.hbm [resolvable:$true] %s57
      %s59 = sshll.u32 [#allocation8], 4
      %s60 = int_to_ptr.vmem [resolvable:$true] %s59
      %65 = dma.hbm_to_vmem [thread:$0]  %s58, 1024, %s60, [#allocation9], 64, 64, 4
    $region17: #{tpu_custom_call.1} parent=1 // pred_fallthru
      _
    // Predicated region
    $region18: #{tpu_custom_call.1} parent=1 // pred_check
      _
    $region19: #{tpu_custom_call.1} parent=1 // pred_check_branch
      %67 = sbr.rel (0) target = $region21
    $region20: #{tpu_custom_call.1} parent=1 // pred_region
      %69 = vsyncadd [#allocation9], 0
      %s71 = sshll.u32 %s4, 4
      %s72 = int_to_ptr.hbm [resolvable:$true] %s71
      %s73 = sshll.u32 [#allocation10], 4
      %s74 = int_to_ptr.vmem [resolvable:$true] %s73
      %76 = dma.hbm_to_vmem [thread:$0]  %s72, 128, %s74, [#allocation9]
    $region21: #{tpu_custom_call.1} parent=1 // pred_fallthru
      _
    // Predicated region
    $region22: #{tpu_custom_call.1} parent=1 // pred_check
      _
    $region23: #{tpu_custom_call.1} parent=1 // pred_check_branch
      %78 = sbr.rel (0) target = $region25
    $region24: #{tpu_custom_call.1} parent=1 // pred_region
      %80 = dma.done [#allocation3], 128
    $region25: #{tpu_custom_call.1} parent=1 // pred_fallthru
      _
    // Predicated region
    $region26: #{tpu_custom_call.1} parent=1 // pred_check
      _
    $region27: #{tpu_custom_call.1} parent=1 // pred_check_branch
      %82 = sbr.rel (0) target = $region29
    $region28: #{tpu_custom_call.1} parent=1 // pred_region
      %84 = dma.done [#allocation6], 512
    $region29: #{tpu_custom_call.1} parent=1 // pred_fallthru
      _
    // Predicated region
    $region30: #{tpu_custom_call.1} parent=1 // pred_check
      _
    $region31: #{tpu_custom_call.1} parent=1 // pred_check_branch
      %86 = sbr.rel (0) target = $region33
    $region32: #{tpu_custom_call.1} parent=1 // pred_region
      %88 = dma.done [#allocation6], 1024
    $region33: #{tpu_custom_call.1} parent=1 // pred_fallthru
      _
    // Predicated region
    $region34: #{tpu_custom_call.1} parent=1 // pred_check
      _
    $region35: #{tpu_custom_call.1} parent=1 // pred_check_branch
      %90 = sbr.rel (0) target = $region37
    $region36: #{tpu_custom_call.1} parent=1 // pred_region
      %92 = dma.done [#allocation9], 1024
    $region37: #{tpu_custom_call.1} parent=1 // pred_fallthru
      _
    // Predicated region
    $region38: #{tpu_custom_call.1} parent=1 // pred_check
      _
    $region39: #{tpu_custom_call.1} parent=1 // pred_check_branch
      %94 = sbr.rel (0) target = $region41
    $region40: #{tpu_custom_call.1} parent=1 // pred_region
      %96 = dma.done [#allocation9], 128
    $region41: #{tpu_custom_call.1} parent=1 // pred_fallthru
      _
    %v98 = vld [vmem:[#allocation2] sm:$0xf]
    %v99 = vld [vmem:[#allocation2 + $0x4] sm:$0xf]
    %v100 = vld [vmem:[#allocation5] sm:$0xf]
    %v101 = vld [vmem:[#allocation5 + $0x4] sm:$0xf]
    %v102 = vld [vmem:[#allocation5 + $0x8] sm:$0xf]
    %v103 = vld [vmem:[#allocation5 + $0xc] sm:$0xf]
    %v104 = vld [vmem:[#allocation5 + $0x10] sm:$0xf]
    %v105 = vld [vmem:[#allocation5 + $0x14] sm:$0xf]
    %v106 = vld [vmem:[#allocation5 + $0x18] sm:$0xf]
    %v107 = vld [vmem:[#allocation5 + $0x1c] sm:$0xf]
    %v108 = vld [vmem:[#allocation10] sm:$0x1]
    %v109 = vperm.slane %v108, 0
    %v112 = vunpack.c.l.b16 %v98
    %v113 = vunpack.c.l.b16 %v99
    %v114 = vpack.c.b16 %v113, %v112
    %v123 = vunpack.c.l.b16 %v100
    %v124 = vunpack.c.l.b16 %v101
    %v125 = vunpack.c.l.b16 %v102
    %v126 = vunpack.c.l.b16 %v103
    %v127 = vunpack.c.l.b16 %v104
    %v128 = vunpack.c.l.b16 %v105
    %v129 = vunpack.c.l.b16 %v106
    %v130 = vunpack.c.l.b16 %v107
    %v131 = vpack.c.b16 %v124, %v123
    %v132 = vpack.c.b16 %v126, %v125
    %v133 = vpack.c.b16 %v128, %v127
    %v134 = vpack.c.b16 %v130, %v129
    %vm139 = vcmask 523264
    %v141 = vsel %vm139, %v114, 0
    %143 = vmatpush.bf16.msra.mxu0 0
    %144 = vmatpush.bf16.msra.mxu0 0
    %145 = vmatpush.bf16.msra.mxu0 0
    %146 = vmatpush.bf16.msra.mxu0 0
    %147 = vmatpush.bf16.msra.mxu0 %v134
    %148 = vmatpush.bf16.msra.mxu0 %v133
    %149 = vmatpush.bf16.msra.mxu0 %v132
    %150 = vmatpush.bf16.msra.mxu0 %v131
    %151 = vmatmul.bf16.gmra.mxu0 %v141
    %v152 = vpop.f32.mrf.mxu0
    %v153 = vadd.f32 %v109, %v152
    %v154 = vpop.f32.mrf.mxu0
    %v155 = vadd.f32 %v109, %v154
    %156 = vdwg.mxu0
    %v157 = vmax.f32 %v153, 0.0
    %v158 = vmax.f32 %v155, 0.0
    %v159 = vpack.c.bf16 %v158, %v157
    %v160 = vld [vmem:[#allocation7] sm:$0xf]
    %v161 = vld [vmem:[#allocation7 + $0x4] sm:$0xf]
    %v162 = vld [vmem:[#allocation7 + $0x8] sm:$0xf]
    %v163 = vld [vmem:[#allocation7 + $0xc] sm:$0xf]
    %v164 = vld [vmem:[#allocation7 + $0x10] sm:$0xf]
    %v165 = vld [vmem:[#allocation7 + $0x14] sm:$0xf]
    %v166 = vld [vmem:[#allocation7 + $0x18] sm:$0xf]
    %v167 = vld [vmem:[#allocation7 + $0x1c] sm:$0xf]
    %v168 = vld [vmem:[#allocation7 + $0x20] sm:$0xf]
    %v169 = vld [vmem:[#allocation7 + $0x24] sm:$0xf]
    %v170 = vld [vmem:[#allocation7 + $0x28] sm:$0xf]
    %v171 = vld [vmem:[#allocation7 + $0x2c] sm:$0xf]
    %v172 = vld [vmem:[#allocation7 + $0x30] sm:$0xf]
    %v173 = vld [vmem:[#allocation7 + $0x34] sm:$0xf]
    %v174 = vld [vmem:[#allocation7 + $0x38] sm:$0xf]
    %v175 = vld [vmem:[#allocation7 + $0x3c] sm:$0xf]
    %v176 = vld [vmem:[#allocation10 + $0x1] sm:$0x1]
    %v177 = vperm.slane %v176, 0
    %v194 = vunpack.c.l.b16 %v160
    %v195 = vunpack.c.l.b16 %v161
    %v196 = vunpack.c.l.b16 %v162
    %v197 = vunpack.c.l.b16 %v163
    %v198 = vunpack.c.l.b16 %v164
    %v199 = vunpack.c.l.b16 %v165
    %v200 = vunpack.c.l.b16 %v166
    %v201 = vunpack.c.l.b16 %v167
    %v202 = vunpack.c.l.b16 %v168
    %v203 = vunpack.c.l.b16 %v169
    %v204 = vunpack.c.l.b16 %v170
    %v205 = vunpack.c.l.b16 %v171
    %v206 = vunpack.c.l.b16 %v172
    %v207 = vunpack.c.l.b16 %v173
    %v208 = vunpack.c.l.b16 %v174
    %v209 = vunpack.c.l.b16 %v175
    %v210 = vpack.c.b16 %v195, %v194
    %v211 = vpack.c.b16 %v197, %v196
    %v212 = vpack.c.b16 %v199, %v198
    %v213 = vpack.c.b16 %v201, %v200
    %v214 = vpack.c.b16 %v203, %v202
    %v215 = vpack.c.b16 %v205, %v204
    %v216 = vpack.c.b16 %v207, %v206
    %v217 = vpack.c.b16 %v209, %v208
    %226 = vmatpush.bf16.msra.mxu0 %v217
    %227 = vmatpush.bf16.msra.mxu0 %v216
    %228 = vmatpush.bf16.msra.mxu0 %v215
    %229 = vmatpush.bf16.msra.mxu0 %v214
    %230 = vmatpush.bf16.msra.mxu0 %v213
    %231 = vmatpush.bf16.msra.mxu0 %v212
    %232 = vmatpush.bf16.msra.mxu0 %v211
    %233 = vmatpush.bf16.msra.mxu0 %v210
    %234 = vmatmul.bf16.gmra.mxu0 %v159
    %v235 = vpop.f32.mrf.mxu0
    %v236 = vadd.f32 %v177, %v235
    %v237 = vpop.f32.mrf.mxu0
    %v238 = vadd.f32 %v177, %v237
    %239 = vdwg.mxu0
    %v240 = vmax.f32 %v236, 0.0
    %v241 = vmax.f32 %v238, 0.0
    %v242 = vpack.c.bf16 %v241, %v240
    %v243 = vld [vmem:[#allocation8] sm:$0xf]
    %v244 = vld [vmem:[#allocation8 + $0x4] sm:$0xf]
    %v245 = vld [vmem:[#allocation8 + $0x8] sm:$0xf]
    %v246 = vld [vmem:[#allocation8 + $0xc] sm:$0xf]
    %v247 = vld [vmem:[#allocation8 + $0x10] sm:$0xf]
    %v248 = vld [vmem:[#allocation8 + $0x14] sm:$0xf]
    %v249 = vld [vmem:[#allocation8 + $0x18] sm:$0xf]
    %v250 = vld [vmem:[#allocation8 + $0x1c] sm:$0xf]
    %v251 = vld [vmem:[#allocation8 + $0x20] sm:$0xf]
    %v252 = vld [vmem:[#allocation8 + $0x24] sm:$0xf]
    %v253 = vld [vmem:[#allocation8 + $0x28] sm:$0xf]
    %v254 = vld [vmem:[#allocation8 + $0x2c] sm:$0xf]
    %v255 = vld [vmem:[#allocation8 + $0x30] sm:$0xf]
    %v256 = vld [vmem:[#allocation8 + $0x34] sm:$0xf]
    %v257 = vld [vmem:[#allocation8 + $0x38] sm:$0xf]
    %v258 = vld [vmem:[#allocation8 + $0x3c] sm:$0xf]
    %v259 = vld [vmem:[#allocation10 + $0x2] sm:$0x1]
    %v260 = vperm.slane %v259, 0
    %v277 = vunpack.c.l.b16 %v243
    %v278 = vunpack.c.l.b16 %v244
    %v279 = vunpack.c.l.b16 %v245
    %v280 = vunpack.c.l.b16 %v246
    %v281 = vunpack.c.l.b16 %v247
    %v282 = vunpack.c.l.b16 %v248
    %v283 = vunpack.c.l.b16 %v249
    %v284 = vunpack.c.l.b16 %v250
    %v285 = vunpack.c.l.b16 %v251
    %v286 = vunpack.c.l.b16 %v252
    %v287 = vunpack.c.l.b16 %v253
    %v288 = vunpack.c.l.b16 %v254
    %v289 = vunpack.c.l.b16 %v255
    %v290 = vunpack.c.l.b16 %v256
    %v291 = vunpack.c.l.b16 %v257
    %v292 = vunpack.c.l.b16 %v258
    %v293 = vpack.c.b16 %v278, %v277
    %v294 = vpack.c.b16 %v280, %v279
    %v295 = vpack.c.b16 %v282, %v281
    %v296 = vpack.c.b16 %v284, %v283
    %v297 = vpack.c.b16 %v286, %v285
    %v298 = vpack.c.b16 %v288, %v287
    %v299 = vpack.c.b16 %v290, %v289
    %v300 = vpack.c.b16 %v292, %v291
    %309 = vmatpush.bf16.msra.mxu0 %v300
    %310 = vmatpush.bf16.msra.mxu0 %v299
    %311 = vmatpush.bf16.msra.mxu0 %v298
    %312 = vmatpush.bf16.msra.mxu0 %v297
    %313 = vmatpush.bf16.msra.mxu0 %v296
    %314 = vmatpush.bf16.msra.mxu0 %v295
    %315 = vmatpush.bf16.msra.mxu0 %v294
    %316 = vmatpush.bf16.msra.mxu0 %v293
    %317 = vmatmul.bf16.gmra.mxu0 %v242
    %v318 = vpop.f32.mrf.mxu0
    %v319 = vadd.f32 %v260, %v318
    %v320 = vpop.f32.mrf.mxu0
    %v321 = vadd.f32 %v260, %v320
    %322 = vdwg.mxu0
    %323 = vst [vmem:[#allocation11] sm:$0xff] %v319
    %324 = vst [vmem:[#allocation11 + $0x8] sm:$0xff] %v321
    // Predicated region
    $region42: #{tpu_custom_call.1} parent=1 // pred_check
      _
    $region43: #{tpu_custom_call.1} parent=1 // pred_check_branch
      %326 = sbr.rel (0) target = $region45
    $region44: #{tpu_custom_call.1} parent=1 // pred_region
      %328 = vsyncadd [#allocation4], 0
      %s329 = sshll.u32 [#allocation11], 4
      %s330 = int_to_ptr.vmem [resolvable:$true] %s329
      %s331 = sshll.u32 %s5, 4
      %s332 = int_to_ptr.hbm [resolvable:$true] %s331
      %337 = dma.vmem_to_hbm [thread:$0]  %s330, 256, %s332, [#allocation4], 128, 128, 8
    $region45: #{tpu_custom_call.1} parent=1 // pred_fallthru
      _
    // Predicated region
    $region46: #{tpu_custom_call.1} parent=1 // pred_check
      _
    $region47: #{tpu_custom_call.1} parent=1 // pred_check_branch
      %339 = sbr.rel (0) target = $region49
    $region48: #{tpu_custom_call.1} parent=1 // pred_region
      %341 = dma.done [#allocation4], 256
    $region49: #{tpu_custom_call.1} parent=1 // pred_fallthru
      _
    %342 = vsyncpa [#allocation3], 1
    %343 = vsyncpa [#allocation6], 1
    %344 = vsyncpa [#allocation9], 1
    %345 = vsyncpa [#allocation4], 1

</llo_original>
